<compile_context>
chip_gen: v7x
topology: tpu7x:2x2x1
jax: 0.10.0
libtpu: 0.0.40
codegen_flags: <defaults>
</compile_context>

<pallas_src>
import numpy as np
import jax
import jax.numpy as jnp
from jax.experimental import pallas as pl
from jax.experimental.pallas import tpu as pltpu


# --------------------------------------------------------------------------
# Init-time constants (numpy): control points and the TPS L^-1 matrix.
# --------------------------------------------------------------------------
def _compute_L_inverse_np(px, py):
    """numpy replica of TpsGridGen.compute_L_inverse (float64 for stability)."""
    n = px.shape[0]
    xm = px.reshape(n, 1)
    ym = py.reshape(n, 1)
    d2 = (xm - xm.T) ** 2 + (ym - ym.T) ** 2
    d2[d2 == 0] = 1.0
    K = d2 * np.log(d2)
    P = np.concatenate([np.ones((n, 1)), xm, ym], axis=1)
    L = np.block([[K, P], [P.T, np.zeros((3, 3))]])
    return np.linalg.inv(L)


def _choose_row_pack(out_h, out_w):
    """Smallest k with (k*out_w) % 128 == 0 and out_h % k == 0 (lane-dense rows)."""
    if out_w % 128 == 0:
        return 1
    for k in range(1, min(out_h, 128) + 1):
        if out_h % k == 0 and (k * out_w) % 128 == 0 and k * out_w <= 2048:
            return k
    return 1


def _choose_row_block(r_rows, kw, batch):
    """Largest multiple-of-8 buffer-row block dividing r_rows that leaves >=2 grid
    steps (two v7x TensorCores) and keeps double-buffered outputs well inside
    v5e's 16 MiB default scoped-VMEM."""
    budget = 8 * 1024 * 1024
    for cand in (256, 128, 64, 32, 16, 8):
        if (r_rows % cand == 0 and r_rows // cand >= 2
                and 16 * batch * cand * kw <= budget):
            return cand
    return r_rows  # single full-extent block (always legal)


# --------------------------------------------------------------------------
# Pallas kernel
# --------------------------------------------------------------------------
def _make_tps_kernel(out_h, out_w, k_pack, ctrl_x, ctrl_y, batch,
                     th_rows, strip_h):
    """Kernel computing one row-block of the warped grid for all batch elements.

    wa_ref : SMEM (2*B*(N+3),) f32 (scalar-prefetched), flat [b, coord, coef]
             with coef order [W_0..W_{N-1}, A_0, A_1, A_2].
    ox_ref / oy_ref : VMEM (B, th_rows, k_pack*out_w) f32 -- X' / Y' coordinates,
             k_pack image rows packed per buffer row (lane-dense output).
    """
    n_ctrl = len(ctrl_x)
    n_coef = n_ctrl + 3
    kw = k_pack * out_w
    n_strips = th_rows // strip_h
    sy = 2.0 / float(max(out_h - 1, 1))
    sx = 2.0 / float(max(out_w - 1, 1))
    inv_w = 1.0 / float(out_w)

    def kernel(wa_ref, ox_ref, oy_ref):
        # Hoist every coefficient into a traced scalar once (no per-strip SMEM
        # re-reads); splats at use-sites are cheap scalar operands.
        coef = [[[wa_ref[(2 * b + c) * n_coef + j] for j in range(n_coef)]
                 for c in range(2)] for b in range(batch)]

        # Lane-dependent, strip-invariant quantities: image column and the
        # row-within-pack index, recovered from the packed lane index.  The
        # +0.5 guard makes the f32 floor-divide exact (margin 0.5/out_w).
        lane = jax.lax.broadcasted_iota(
            jnp.int32, (strip_h, kw), 1).astype(jnp.float32)
        rw = jnp.floor((lane + 0.5) * inv_w)          # row index within the pack
        col = lane - rw * float(out_w)                # image column
        gx = col * sx - 1.0
        sub = jax.lax.broadcasted_iota(
            jnp.int32, (strip_h, kw), 0).astype(jnp.float32)

        row_base = (pl.program_id(0) * th_rows).astype(jnp.float32)

        # Vreg-resident strips; basis evaluation fused with the accumulation
        # (control-point loop OUTER, batch/coord INNER) so no per-basis
        # (th_rows, kw) temporaries are ever materialized / spilled.
        for s in range(n_strips):
            r0 = s * strip_h
            buf_row = row_base + float(r0) + sub
            img_row = buf_row * float(k_pack) + rw
            gy = img_row * sy - 1.0

            # Affine init for every (batch, coord).
            accs = []
            for b in range(batch):
                pair = []
                for c in range(2):
                    a = coef[b][c]
                    pair.append(a[n_ctrl]
                                + a[n_ctrl + 1] * gx
                                + a[n_ctrl + 2] * gy)
                accs.append(pair)

            # Fused TPS basis + weighted accumulation.
            for n in range(n_ctrl):
                dx = gx - ctrl_x[n]
                dy = gy - ctrl_y[n]
                d2 = dx * dx + dy * dy
                d2 = jnp.where(d2 == 0.0, jnp.float32(1.0), d2)  # log(0) guard
                u = d2 * jnp.log(d2)
                for b in range(batch):
                    accs[b][0] = accs[b][0] + coef[b][0][n] * u
                    accs[b][1] = accs[b][1] + coef[b][1][n] * u

            for b in range(batch):
                ox_ref[b, r0:r0 + strip_h, :] = accs[b][0]
                oy_ref[b, r0:r0 + strip_h, :] = accs[b][1]

    return kernel


# --------------------------------------------------------------------------
# Module
# --------------------------------------------------------------------------
class TpsGridGen:
    def __init__(self, out_h=256, out_w=192, use_regular_grid=True,
                 grid_size=3, reg_factor=0, use_cuda=True):
        # reg_factor / use_cuda are unused in the reference forward path.
        assert use_regular_grid, "only the regular-grid variant is implemented"
        self.out_h = int(out_h)
        self.out_w = int(out_w)
        self.grid_size = int(grid_size)
        self.N = self.grid_size * self.grid_size

        ax = np.linspace(-1.0, 1.0, self.grid_size)
        py_m, px_m = np.meshgrid(ax, ax)          # torch: P_Y, P_X = meshgrid(ax, ax)
        px = px_m.reshape(-1).astype(np.float64)
        py = py_m.reshape(-1).astype(np.float64)
        li = _compute_L_inverse_np(px, py)        # (N+3, N+3)

        # Hoisted, forward-invariant parameters (computed once, not per call).
        self._ctrl_x = tuple(float(v) for v in px)
        self._ctrl_y = tuple(float(v) for v in py)
        self._p_base = jnp.asarray(np.concatenate([px, py]), jnp.float32)   # (2N,)
        self._li_cols = jnp.asarray(li[:, :self.N], jnp.float32)            # (N+3, N)

        # Lane-dense row packing factor (e.g. W=192 -> k=2 -> 384 lanes).
        self._k_pack = _choose_row_pack(self.out_h, self.out_w)

    def __call__(self, theta):
        theta = jnp.asarray(theta, jnp.float32)
        if theta.ndim == 4:                        # (B, 2N, 1, 1) -> (B, 2N)
            theta = theta.reshape(theta.shape[0], theta.shape[1])
        b = theta.shape[0]
        n = self.N
        h, w = self.out_h, self.out_w
        kp = self._k_pack
        kw = kp * w
        r_rows = h // kp

        # Tiny per-call coefficient solve (glue JAX):
        # Q = theta + P_base, [W ; A] = L^-1[:, :N] @ Q  ->  flat (2B*(N+3),).
        q = (theta + self._p_base[None, :]).reshape(b, 2, n)
        wa = jnp.einsum("kn,bcn->bck", self._li_cols, q,
                        precision=jax.lax.Precision.HIGHEST)        # (B, 2, N+3)
        wa_flat = wa.reshape(-1)

        th_rows = _choose_row_block(r_rows, kw, b)
        strip_h = 8 if th_rows % 8 == 0 else th_rows
        kernel = _make_tps_kernel(h, w, kp, self._ctrl_x, self._ctrl_y, b,
                                  th_rows, strip_h)

        out_sds = jax.ShapeDtypeStruct((b, r_rows, kw), jnp.float32)
        # index_maps receive the scalar-prefetch ref as a trailing positional arg.
        out_block_x = pl.BlockSpec((b, th_rows, kw), lambda i, wa_s: (0, i, 0))
        out_block_y = pl.BlockSpec((b, th_rows, kw), lambda i, wa_s: (0, i, 0))

        cost = pl.CostEstimate(
            flops=int(h * w * (54 + 46 * b)),
            transcendentals=int(9 * h * w),
            bytes_accessed=int(2 * b * h * w * 4 + wa_flat.size * 4),
        )

        ox, oy = pl.pallas_call(
            kernel,
            out_shape=(out_sds, out_sds),
            grid_spec=pltpu.PrefetchScalarGridSpec(
                num_scalar_prefetch=1,
                grid=(r_rows // th_rows,),
                in_specs=[],
                out_specs=(out_block_x, out_block_y),
            ),
            compiler_params=pltpu.CompilerParams(
                dimension_semantics=("parallel",)),
            cost_estimate=cost,
        )(wa_flat)

        # Free reshapes: (B, H/k, k*W) -> (B, H, W); final channel interleave is
        # one small XLA op in the wrapper (module contract is (B, H, W, 2)).
        ox = ox.reshape(b, h, w)
        oy = oy.reshape(b, h, w)
        return jnp.stack([ox, oy], axis=-1)


# --------------------------------------------------------------------------
# Pure-numpy reference (mirrors the PyTorch math) for a correctness check.
# --------------------------------------------------------------------------
def _tps_reference_np(theta, out_h, out_w, grid_size):
    theta = np.asarray(theta, np.float64)
    b = theta.shape[0]
    n = grid_size * grid_size
    ax = np.linspace(-1.0, 1.0, grid_size)
    py_m, px_m = np.meshgrid(ax, ax)
    px = px_m.reshape(-1)
    py = py_m.reshape(-1)
    li = _compute_L_inverse_np(px, py)
    gx_m, gy_m = np.meshgrid(np.linspace(-1, 1, out_w), np.linspace(-1, 1, out_h))

    qx = theta[:, :n] + px[None]
    qy = theta[:, n:] + py[None]
    wx = qx @ li[:n, :n].T                      # (B, N)
    wy = qy @ li[:n, :n].T
    a_x = qx @ li[n:, :n].T                     # (B, 3)
    a_y = qy @ li[n:, :n].T

    d2 = (gx_m[..., None] - px) ** 2 + (gy_m[..., None] - py) ** 2   # (H, W, N)
    d2[d2 == 0] = 1.0
    u = d2 * np.log(d2)

    xs = (a_x[:, None, None, 0] + a_x[:, None, None, 1] * gx_m[None]
          + a_x[:, None, None, 2] * gy_m[None] + np.einsum("bn,hwn->bhw", wx, u))
    ys = (a_y[:, None, None, 0] + a_y[:, None, None, 1] * gx_m[None]
          + a_y[:, None, None, 2] * gy_m[None] + np.einsum("bn,hwn->bhw", wy, u))
    return np.stack([xs, ys], axis=-1)


if __name__ == "__main__":
    key = jax.random.PRNGKey(0)
    GRID = 3
    N = GRID * GRID
    cases = [
        dict(b=2, h=16, w=16),   # k_pack=8 -> 128-lane rows
        dict(b=3, h=20, w=28),   # no packing possible -> full-extent fallback
    ]
    for idx, c in enumerate(cases):
        theta = 0.1 * jax.random.normal(jax.random.fold_in(key, idx),
                                        (c["b"], 2 * N), jnp.float32)
        tps = TpsGridGen(out_h=c["h"], out_w=c["w"], grid_size=GRID, use_cuda=False)
        out = jax.block_until_ready(jax.jit(tps.__call__)(theta))
        assert out.shape == (c["b"], c["h"], c["w"], 2), out.shape
        ref = _tps_reference_np(np.asarray(theta), c["h"], c["w"], GRID)
        max_err = float(np.max(np.abs(np.asarray(out, np.float64) - ref)))
        assert max_err < 5e-3, f"case {idx}: max abs error vs reference: {max_err}"
    print("KERNEL_OK")
</pallas_src>

<mosaic_0001>
module attributes {stable_mosaic.version = 11 : i64} {
  func.func @kernel(%arg0: i32, %arg1: memref<48xf32, #tpu.memory_space<smem>>, %arg2: memref<2x2x128xf32, #tpu.memory_space<vmem>>, %arg3: memref<2x2x128xf32, #tpu.memory_space<vmem>>) attributes {dimension_semantics = [#tpu.dimension_semantics<parallel>], iteration_bounds = array<i64: 1>, scalar_prefetch = 1 : i64, scratch_operands = 0 : i64, tpu.core_type = #tpu.core_type<tc>, window_params = [{transform_indices = @transform_0, window_bounds = array<i64: 2, 2, 128>}, {transform_indices = @transform_1, window_bounds = array<i64: 2, 2, 128>}]} {
    %c0 = arith.constant 0 : index
    %0 = memref.load %arg1[%c0] : memref<48xf32, #tpu.memory_space<smem>>
    %c1 = arith.constant 1 : index
    %1 = memref.load %arg1[%c1] : memref<48xf32, #tpu.memory_space<smem>>
    %c2 = arith.constant 2 : index
    %2 = memref.load %arg1[%c2] : memref<48xf32, #tpu.memory_space<smem>>
    %c3 = arith.constant 3 : index
    %3 = memref.load %arg1[%c3] : memref<48xf32, #tpu.memory_space<smem>>
    %c4 = arith.constant 4 : index
    %4 = memref.load %arg1[%c4] : memref<48xf32, #tpu.memory_space<smem>>
    %c5 = arith.constant 5 : index
    %5 = memref.load %arg1[%c5] : memref<48xf32, #tpu.memory_space<smem>>
    %c6 = arith.constant 6 : index
    %6 = memref.load %arg1[%c6] : memref<48xf32, #tpu.memory_space<smem>>
    %c7 = arith.constant 7 : index
    %7 = memref.load %arg1[%c7] : memref<48xf32, #tpu.memory_space<smem>>
    %c8 = arith.constant 8 : index
    %8 = memref.load %arg1[%c8] : memref<48xf32, #tpu.memory_space<smem>>
    %c9 = arith.constant 9 : index
    %9 = memref.load %arg1[%c9] : memref<48xf32, #tpu.memory_space<smem>>
    %c10 = arith.constant 10 : index
    %10 = memref.load %arg1[%c10] : memref<48xf32, #tpu.memory_space<smem>>
    %c11 = arith.constant 11 : index
    %11 = memref.load %arg1[%c11] : memref<48xf32, #tpu.memory_space<smem>>
    %c12 = arith.constant 12 : index
    %12 = memref.load %arg1[%c12] : memref<48xf32, #tpu.memory_space<smem>>
    %c13 = arith.constant 13 : index
    %13 = memref.load %arg1[%c13] : memref<48xf32, #tpu.memory_space<smem>>
    %c14 = arith.constant 14 : index
    %14 = memref.load %arg1[%c14] : memref<48xf32, #tpu.memory_space<smem>>
    %c15 = arith.constant 15 : index
    %15 = memref.load %arg1[%c15] : memref<48xf32, #tpu.memory_space<smem>>
    %c16 = arith.constant 16 : index
    %16 = memref.load %arg1[%c16] : memref<48xf32, #tpu.memory_space<smem>>
    %c17 = arith.constant 17 : index
    %17 = memref.load %arg1[%c17] : memref<48xf32, #tpu.memory_space<smem>>
    %c18 = arith.constant 18 : index
    %18 = memref.load %arg1[%c18] : memref<48xf32, #tpu.memory_space<smem>>
    %c19 = arith.constant 19 : index
    %19 = memref.load %arg1[%c19] : memref<48xf32, #tpu.memory_space<smem>>
    %c20 = arith.constant 20 : index
    %20 = memref.load %arg1[%c20] : memref<48xf32, #tpu.memory_space<smem>>
    %c21 = arith.constant 21 : index
    %21 = memref.load %arg1[%c21] : memref<48xf32, #tpu.memory_space<smem>>
    %c22 = arith.constant 22 : index
    %22 = memref.load %arg1[%c22] : memref<48xf32, #tpu.memory_space<smem>>
    %c23 = arith.constant 23 : index
    %23 = memref.load %arg1[%c23] : memref<48xf32, #tpu.memory_space<smem>>
    %c24 = arith.constant 24 : index
    %24 = memref.load %arg1[%c24] : memref<48xf32, #tpu.memory_space<smem>>
    %c25 = arith.constant 25 : index
    %25 = memref.load %arg1[%c25] : memref<48xf32, #tpu.memory_space<smem>>
    %c26 = arith.constant 26 : index
    %26 = memref.load %arg1[%c26] : memref<48xf32, #tpu.memory_space<smem>>
    %c27 = arith.constant 27 : index
    %27 = memref.load %arg1[%c27] : memref<48xf32, #tpu.memory_space<smem>>
    %c28 = arith.constant 28 : index
    %28 = memref.load %arg1[%c28] : memref<48xf32, #tpu.memory_space<smem>>
    %c29 = arith.constant 29 : index
    %29 = memref.load %arg1[%c29] : memref<48xf32, #tpu.memory_space<smem>>
    %c30 = arith.constant 30 : index
    %30 = memref.load %arg1[%c30] : memref<48xf32, #tpu.memory_space<smem>>
    %c31 = arith.constant 31 : index
    %31 = memref.load %arg1[%c31] : memref<48xf32, #tpu.memory_space<smem>>
    %c32 = arith.constant 32 : index
    %32 = memref.load %arg1[%c32] : memref<48xf32, #tpu.memory_space<smem>>
    %c33 = arith.constant 33 : index
    %33 = memref.load %arg1[%c33] : memref<48xf32, #tpu.memory_space<smem>>
    %c34 = arith.constant 34 : index
    %34 = memref.load %arg1[%c34] : memref<48xf32, #tpu.memory_space<smem>>
    %c35 = arith.constant 35 : index
    %35 = memref.load %arg1[%c35] : memref<48xf32, #tpu.memory_space<smem>>
    %c36 = arith.constant 36 : index
    %36 = memref.load %arg1[%c36] : memref<48xf32, #tpu.memory_space<smem>>
    %c37 = arith.constant 37 : index
    %37 = memref.load %arg1[%c37] : memref<48xf32, #tpu.memory_space<smem>>
    %c38 = arith.constant 38 : index
    %38 = memref.load %arg1[%c38] : memref<48xf32, #tpu.memory_space<smem>>
    %c39 = arith.constant 39 : index
    %39 = memref.load %arg1[%c39] : memref<48xf32, #tpu.memory_space<smem>>
    %c40 = arith.constant 40 : index
    %40 = memref.load %arg1[%c40] : memref<48xf32, #tpu.memory_space<smem>>
    %c41 = arith.constant 41 : index
    %41 = memref.load %arg1[%c41] : memref<48xf32, #tpu.memory_space<smem>>
    %c42 = arith.constant 42 : index
    %42 = memref.load %arg1[%c42] : memref<48xf32, #tpu.memory_space<smem>>
    %c43 = arith.constant 43 : index
    %43 = memref.load %arg1[%c43] : memref<48xf32, #tpu.memory_space<smem>>
    %c44 = arith.constant 44 : index
    %44 = memref.load %arg1[%c44] : memref<48xf32, #tpu.memory_space<smem>>
    %c45 = arith.constant 45 : index
    %45 = memref.load %arg1[%c45] : memref<48xf32, #tpu.memory_space<smem>>
    %c46 = arith.constant 46 : index
    %46 = memref.load %arg1[%c46] : memref<48xf32, #tpu.memory_space<smem>>
    %c47 = arith.constant 47 : index
    %47 = memref.load %arg1[%c47] : memref<48xf32, #tpu.memory_space<smem>>
    %48 = tpu.iota {dimensions = array<i32: 1>} : vector<2x128xi32>
    %49 = arith.sitofp %48 : vector<2x128xi32> to vector<2x128xf32>
    %cst = arith.constant 5.000000e-01 : f32
    %50 = vector.broadcast %cst : f32 to vector<2x128xf32>
    %51 = arith.addf %49, %50 : vector<2x128xf32>
    %cst_0 = arith.constant 6.250000e-02 : f32
    %52 = vector.broadcast %cst_0 : f32 to vector<2x128xf32>
    %53 = arith.mulf %51, %52 : vector<2x128xf32>
    %54 = math.floor %53 : vector<2x128xf32>
    %cst_1 = arith.constant 1.600000e+01 : f32
    %55 = vector.broadcast %cst_1 : f32 to vector<2x128xf32>
    %56 = arith.mulf %54, %55 : vector<2x128xf32>
    %57 = arith.subf %49, %56 : vector<2x128xf32>
    %cst_2 = arith.constant 0.13333334 : f32
    %58 = vector.broadcast %cst_2 : f32 to vector<2x128xf32>
    %59 = arith.mulf %57, %58 : vector<2x128xf32>
    %cst_3 = arith.constant 1.000000e+00 : f32
    %60 = vector.broadcast %cst_3 : f32 to vector<2x128xf32>
    %61 = arith.subf %59, %60 : vector<2x128xf32>
    %62 = tpu.iota {dimensions = array<i32: 0>} : vector<2x128xi32>
    %63 = arith.sitofp %62 : vector<2x128xi32> to vector<2x128xf32>
    %c2_i32 = arith.constant 2 : i32
    %64 = arith.muli %arg0, %c2_i32 : i32
    %65 = arith.sitofp %64 : i32 to f32
    %cst_4 = arith.constant 0.000000e+00 : f32
    %66 = arith.addf %65, %cst_4 : f32
    %67 = vector.broadcast %66 : f32 to vector<2x128xf32>
    %68 = arith.addf %67, %63 : vector<2x128xf32>
    %cst_5 = arith.constant 8.000000e+00 : f32
    %69 = vector.broadcast %cst_5 : f32 to vector<2x128xf32>
    %70 = arith.mulf %68, %69 : vector<2x128xf32>
    %71 = arith.addf %70, %54 : vector<2x128xf32>
    %cst_6 = arith.constant 0.13333334 : f32
    %72 = vector.broadcast %cst_6 : f32 to vector<2x128xf32>
    %73 = arith.mulf %71, %72 : vector<2x128xf32>
    %cst_7 = arith.constant 1.000000e+00 : f32
    %74 = vector.broadcast %cst_7 : f32 to vector<2x128xf32>
    %75 = arith.subf %73, %74 : vector<2x128xf32>
    %76 = vector.broadcast %10 : f32 to vector<2x128xf32>
    %77 = arith.mulf %76, %61 : vector<2x128xf32>
    %78 = vector.broadcast %9 : f32 to vector<2x128xf32>
    %79 = arith.addf %78, %77 : vector<2x128xf32>
    %80 = vector.broadcast %11 : f32 to vector<2x128xf32>
    %81 = arith.mulf %80, %75 : vector<2x128xf32>
    %82 = arith.addf %79, %81 : vector<2x128xf32>
    %83 = vector.broadcast %22 : f32 to vector<2x128xf32>
    %84 = arith.mulf %83, %61 : vector<2x128xf32>
    %85 = vector.broadcast %21 : f32 to vector<2x128xf32>
    %86 = arith.addf %85, %84 : vector<2x128xf32>
    %87 = vector.broadcast %23 : f32 to vector<2x128xf32>
    %88 = arith.mulf %87, %75 : vector<2x128xf32>
    %89 = arith.addf %86, %88 : vector<2x128xf32>
    %90 = vector.broadcast %34 : f32 to vector<2x128xf32>
    %91 = arith.mulf %90, %61 : vector<2x128xf32>
    %92 = vector.broadcast %33 : f32 to vector<2x128xf32>
    %93 = arith.addf %92, %91 : vector<2x128xf32>
    %94 = vector.broadcast %35 : f32 to vector<2x128xf32>
    %95 = arith.mulf %94, %75 : vector<2x128xf32>
    %96 = arith.addf %93, %95 : vector<2x128xf32>
    %97 = vector.broadcast %46 : f32 to vector<2x128xf32>
    %98 = arith.mulf %97, %61 : vector<2x128xf32>
    %99 = vector.broadcast %45 : f32 to vector<2x128xf32>
    %100 = arith.addf %99, %98 : vector<2x128xf32>
    %101 = vector.broadcast %47 : f32 to vector<2x128xf32>
    %102 = arith.mulf %101, %75 : vector<2x128xf32>
    %103 = arith.addf %100, %102 : vector<2x128xf32>
    %cst_8 = arith.constant -1.000000e+00 : f32
    %104 = vector.broadcast %cst_8 : f32 to vector<2x128xf32>
    %105 = arith.subf %61, %104 : vector<2x128xf32>
    %cst_9 = arith.constant -1.000000e+00 : f32
    %106 = vector.broadcast %cst_9 : f32 to vector<2x128xf32>
    %107 = arith.subf %75, %106 : vector<2x128xf32>
    %108 = arith.mulf %105, %105 : vector<2x128xf32>
    %109 = arith.mulf %107, %107 : vector<2x128xf32>
    %110 = arith.addf %108, %109 : vector<2x128xf32>
    %cst_10 = arith.constant 0.000000e+00 : f32
    %111 = vector.broadcast %cst_10 : f32 to vector<2x128xf32>
    %112 = arith.cmpf oeq, %110, %111 : vector<2x128xf32>
    %cst_11 = arith.constant 1.000000e+00 : f32
    %113 = vector.broadcast %cst_11 : f32 to vector<2x128xf32>
    %114 = arith.select %112, %113, %110 : vector<2x128xi1>, vector<2x128xf32>
    %115 = math.log %114 : vector<2x128xf32>
    %116 = arith.mulf %114, %115 : vector<2x128xf32>
    %117 = vector.broadcast %0 : f32 to vector<2x128xf32>
    %118 = arith.mulf %117, %116 : vector<2x128xf32>
    %119 = arith.addf %82, %118 : vector<2x128xf32>
    %120 = vector.broadcast %12 : f32 to vector<2x128xf32>
    %121 = arith.mulf %120, %116 : vector<2x128xf32>
    %122 = arith.addf %89, %121 : vector<2x128xf32>
    %123 = vector.broadcast %24 : f32 to vector<2x128xf32>
    %124 = arith.mulf %123, %116 : vector<2x128xf32>
    %125 = arith.addf %96, %124 : vector<2x128xf32>
    %126 = vector.broadcast %36 : f32 to vector<2x128xf32>
    %127 = arith.mulf %126, %116 : vector<2x128xf32>
    %128 = arith.addf %103, %127 : vector<2x128xf32>
    %cst_12 = arith.constant -1.000000e+00 : f32
    %129 = vector.broadcast %cst_12 : f32 to vector<2x128xf32>
    %130 = arith.subf %61, %129 : vector<2x128xf32>
    %cst_13 = arith.constant 0.000000e+00 : f32
    %131 = vector.broadcast %cst_13 : f32 to vector<2x128xf32>
    %132 = arith.subf %75, %131 : vector<2x128xf32>
    %133 = arith.mulf %130, %130 : vector<2x128xf32>
    %134 = arith.mulf %132, %132 : vector<2x128xf32>
    %135 = arith.addf %133, %134 : vector<2x128xf32>
    %cst_14 = arith.constant 0.000000e+00 : f32
    %136 = vector.broadcast %cst_14 : f32 to vector<2x128xf32>
    %137 = arith.cmpf oeq, %135, %136 : vector<2x128xf32>
    %cst_15 = arith.constant 1.000000e+00 : f32
    %138 = vector.broadcast %cst_15 : f32 to vector<2x128xf32>
    %139 = arith.select %137, %138, %135 : vector<2x128xi1>, vector<2x128xf32>
    %140 = math.log %139 : vector<2x128xf32>
    %141 = arith.mulf %139, %140 : vector<2x128xf32>
    %142 = vector.broadcast %1 : f32 to vector<2x128xf32>
    %143 = arith.mulf %142, %141 : vector<2x128xf32>
    %144 = arith.addf %119, %143 : vector<2x128xf32>
    %145 = vector.broadcast %13 : f32 to vector<2x128xf32>
    %146 = arith.mulf %145, %141 : vector<2x128xf32>
    %147 = arith.addf %122, %146 : vector<2x128xf32>
    %148 = vector.broadcast %25 : f32 to vector<2x128xf32>
    %149 = arith.mulf %148, %141 : vector<2x128xf32>
    %150 = arith.addf %125, %149 : vector<2x128xf32>
    %151 = vector.broadcast %37 : f32 to vector<2x128xf32>
    %152 = arith.mulf %151, %141 : vector<2x128xf32>
    %153 = arith.addf %128, %152 : vector<2x128xf32>
    %cst_16 = arith.constant -1.000000e+00 : f32
    %154 = vector.broadcast %cst_16 : f32 to vector<2x128xf32>
    %155 = arith.subf %61, %154 : vector<2x128xf32>
    %cst_17 = arith.constant 1.000000e+00 : f32
    %156 = vector.broadcast %cst_17 : f32 to vector<2x128xf32>
    %157 = arith.subf %75, %156 : vector<2x128xf32>
    %158 = arith.mulf %155, %155 : vector<2x128xf32>
    %159 = arith.mulf %157, %157 : vector<2x128xf32>
    %160 = arith.addf %158, %159 : vector<2x128xf32>
    %cst_18 = arith.constant 0.000000e+00 : f32
    %161 = vector.broadcast %cst_18 : f32 to vector<2x128xf32>
    %162 = arith.cmpf oeq, %160, %161 : vector<2x128xf32>
    %cst_19 = arith.constant 1.000000e+00 : f32
    %163 = vector.broadcast %cst_19 : f32 to vector<2x128xf32>
    %164 = arith.select %162, %163, %160 : vector<2x128xi1>, vector<2x128xf32>
    %165 = math.log %164 : vector<2x128xf32>
    %166 = arith.mulf %164, %165 : vector<2x128xf32>
    %167 = vector.broadcast %2 : f32 to vector<2x128xf32>
    %168 = arith.mulf %167, %166 : vector<2x128xf32>
    %169 = arith.addf %144, %168 : vector<2x128xf32>
    %170 = vector.broadcast %14 : f32 to vector<2x128xf32>
    %171 = arith.mulf %170, %166 : vector<2x128xf32>
    %172 = arith.addf %147, %171 : vector<2x128xf32>
    %173 = vector.broadcast %26 : f32 to vector<2x128xf32>
    %174 = arith.mulf %173, %166 : vector<2x128xf32>
    %175 = arith.addf %150, %174 : vector<2x128xf32>
    %176 = vector.broadcast %38 : f32 to vector<2x128xf32>
    %177 = arith.mulf %176, %166 : vector<2x128xf32>
    %178 = arith.addf %153, %177 : vector<2x128xf32>
    %cst_20 = arith.constant 0.000000e+00 : f32
    %179 = vector.broadcast %cst_20 : f32 to vector<2x128xf32>
    %180 = arith.subf %61, %179 : vector<2x128xf32>
    %cst_21 = arith.constant -1.000000e+00 : f32
    %181 = vector.broadcast %cst_21 : f32 to vector<2x128xf32>
    %182 = arith.subf %75, %181 : vector<2x128xf32>
    %183 = arith.mulf %180, %180 : vector<2x128xf32>
    %184 = arith.mulf %182, %182 : vector<2x128xf32>
    %185 = arith.addf %183, %184 : vector<2x128xf32>
    %cst_22 = arith.constant 0.000000e+00 : f32
    %186 = vector.broadcast %cst_22 : f32 to vector<2x128xf32>
    %187 = arith.cmpf oeq, %185, %186 : vector<2x128xf32>
    %cst_23 = arith.constant 1.000000e+00 : f32
    %188 = vector.broadcast %cst_23 : f32 to vector<2x128xf32>
    %189 = arith.select %187, %188, %185 : vector<2x128xi1>, vector<2x128xf32>
    %190 = math.log %189 : vector<2x128xf32>
    %191 = arith.mulf %189, %190 : vector<2x128xf32>
    %192 = vector.broadcast %3 : f32 to vector<2x128xf32>
    %193 = arith.mulf %192, %191 : vector<2x128xf32>
    %194 = arith.addf %169, %193 : vector<2x128xf32>
    %195 = vector.broadcast %15 : f32 to vector<2x128xf32>
    %196 = arith.mulf %195, %191 : vector<2x128xf32>
    %197 = arith.addf %172, %196 : vector<2x128xf32>
    %198 = vector.broadcast %27 : f32 to vector<2x128xf32>
    %199 = arith.mulf %198, %191 : vector<2x128xf32>
    %200 = arith.addf %175, %199 : vector<2x128xf32>
    %201 = vector.broadcast %39 : f32 to vector<2x128xf32>
    %202 = arith.mulf %201, %191 : vector<2x128xf32>
    %203 = arith.addf %178, %202 : vector<2x128xf32>
    %cst_24 = arith.constant 0.000000e+00 : f32
    %204 = vector.broadcast %cst_24 : f32 to vector<2x128xf32>
    %205 = arith.subf %61, %204 : vector<2x128xf32>
    %cst_25 = arith.constant 0.000000e+00 : f32
    %206 = vector.broadcast %cst_25 : f32 to vector<2x128xf32>
    %207 = arith.subf %75, %206 : vector<2x128xf32>
    %208 = arith.mulf %205, %205 : vector<2x128xf32>
    %209 = arith.mulf %207, %207 : vector<2x128xf32>
    %210 = arith.addf %208, %209 : vector<2x128xf32>
    %cst_26 = arith.constant 0.000000e+00 : f32
    %211 = vector.broadcast %cst_26 : f32 to vector<2x128xf32>
    %212 = arith.cmpf oeq, %210, %211 : vector<2x128xf32>
    %cst_27 = arith.constant 1.000000e+00 : f32
    %213 = vector.broadcast %cst_27 : f32 to vector<2x128xf32>
    %214 = arith.select %212, %213, %210 : vector<2x128xi1>, vector<2x128xf32>
    %215 = math.log %214 : vector<2x128xf32>
    %216 = arith.mulf %214, %215 : vector<2x128xf32>
    %217 = vector.broadcast %4 : f32 to vector<2x128xf32>
    %218 = arith.mulf %217, %216 : vector<2x128xf32>
    %219 = arith.addf %194, %218 : vector<2x128xf32>
    %220 = vector.broadcast %16 : f32 to vector<2x128xf32>
    %221 = arith.mulf %220, %216 : vector<2x128xf32>
    %222 = arith.addf %197, %221 : vector<2x128xf32>
    %223 = vector.broadcast %28 : f32 to vector<2x128xf32>
    %224 = arith.mulf %223, %216 : vector<2x128xf32>
    %225 = arith.addf %200, %224 : vector<2x128xf32>
    %226 = vector.broadcast %40 : f32 to vector<2x128xf32>
    %227 = arith.mulf %226, %216 : vector<2x128xf32>
    %228 = arith.addf %203, %227 : vector<2x128xf32>
    %cst_28 = arith.constant 0.000000e+00 : f32
    %229 = vector.broadcast %cst_28 : f32 to vector<2x128xf32>
    %230 = arith.subf %61, %229 : vector<2x128xf32>
    %cst_29 = arith.constant 1.000000e+00 : f32
    %231 = vector.broadcast %cst_29 : f32 to vector<2x128xf32>
    %232 = arith.subf %75, %231 : vector<2x128xf32>
    %233 = arith.mulf %230, %230 : vector<2x128xf32>
    %234 = arith.mulf %232, %232 : vector<2x128xf32>
    %235 = arith.addf %233, %234 : vector<2x128xf32>
    %cst_30 = arith.constant 0.000000e+00 : f32
    %236 = vector.broadcast %cst_30 : f32 to vector<2x128xf32>
    %237 = arith.cmpf oeq, %235, %236 : vector<2x128xf32>
    %cst_31 = arith.constant 1.000000e+00 : f32
    %238 = vector.broadcast %cst_31 : f32 to vector<2x128xf32>
    %239 = arith.select %237, %238, %235 : vector<2x128xi1>, vector<2x128xf32>
    %240 = math.log %239 : vector<2x128xf32>
    %241 = arith.mulf %239, %240 : vector<2x128xf32>
    %242 = vector.broadcast %5 : f32 to vector<2x128xf32>
    %243 = arith.mulf %242, %241 : vector<2x128xf32>
    %244 = arith.addf %219, %243 : vector<2x128xf32>
    %245 = vector.broadcast %17 : f32 to vector<2x128xf32>
    %246 = arith.mulf %245, %241 : vector<2x128xf32>
    %247 = arith.addf %222, %246 : vector<2x128xf32>
    %248 = vector.broadcast %29 : f32 to vector<2x128xf32>
    %249 = arith.mulf %248, %241 : vector<2x128xf32>
    %250 = arith.addf %225, %249 : vector<2x128xf32>
    %251 = vector.broadcast %41 : f32 to vector<2x128xf32>
    %252 = arith.mulf %251, %241 : vector<2x128xf32>
    %253 = arith.addf %228, %252 : vector<2x128xf32>
    %cst_32 = arith.constant 1.000000e+00 : f32
    %254 = vector.broadcast %cst_32 : f32 to vector<2x128xf32>
    %255 = arith.subf %61, %254 : vector<2x128xf32>
    %cst_33 = arith.constant -1.000000e+00 : f32
    %256 = vector.broadcast %cst_33 : f32 to vector<2x128xf32>
    %257 = arith.subf %75, %256 : vector<2x128xf32>
    %258 = arith.mulf %255, %255 : vector<2x128xf32>
    %259 = arith.mulf %257, %257 : vector<2x128xf32>
    %260 = arith.addf %258, %259 : vector<2x128xf32>
    %cst_34 = arith.constant 0.000000e+00 : f32
    %261 = vector.broadcast %cst_34 : f32 to vector<2x128xf32>
    %262 = arith.cmpf oeq, %260, %261 : vector<2x128xf32>
    %cst_35 = arith.constant 1.000000e+00 : f32
    %263 = vector.broadcast %cst_35 : f32 to vector<2x128xf32>
    %264 = arith.select %262, %263, %260 : vector<2x128xi1>, vector<2x128xf32>
    %265 = math.log %264 : vector<2x128xf32>
    %266 = arith.mulf %264, %265 : vector<2x128xf32>
    %267 = vector.broadcast %6 : f32 to vector<2x128xf32>
    %268 = arith.mulf %267, %266 : vector<2x128xf32>
    %269 = arith.addf %244, %268 : vector<2x128xf32>
    %270 = vector.broadcast %18 : f32 to vector<2x128xf32>
    %271 = arith.mulf %270, %266 : vector<2x128xf32>
    %272 = arith.addf %247, %271 : vector<2x128xf32>
    %273 = vector.broadcast %30 : f32 to vector<2x128xf32>
    %274 = arith.mulf %273, %266 : vector<2x128xf32>
    %275 = arith.addf %250, %274 : vector<2x128xf32>
    %276 = vector.broadcast %42 : f32 to vector<2x128xf32>
    %277 = arith.mulf %276, %266 : vector<2x128xf32>
    %278 = arith.addf %253, %277 : vector<2x128xf32>
    %cst_36 = arith.constant 1.000000e+00 : f32
    %279 = vector.broadcast %cst_36 : f32 to vector<2x128xf32>
    %280 = arith.subf %61, %279 : vector<2x128xf32>
    %cst_37 = arith.constant 0.000000e+00 : f32
    %281 = vector.broadcast %cst_37 : f32 to vector<2x128xf32>
    %282 = arith.subf %75, %281 : vector<2x128xf32>
    %283 = arith.mulf %280, %280 : vector<2x128xf32>
    %284 = arith.mulf %282, %282 : vector<2x128xf32>
    %285 = arith.addf %283, %284 : vector<2x128xf32>
    %cst_38 = arith.constant 0.000000e+00 : f32
    %286 = vector.broadcast %cst_38 : f32 to vector<2x128xf32>
    %287 = arith.cmpf oeq, %285, %286 : vector<2x128xf32>
    %cst_39 = arith.constant 1.000000e+00 : f32
    %288 = vector.broadcast %cst_39 : f32 to vector<2x128xf32>
    %289 = arith.select %287, %288, %285 : vector<2x128xi1>, vector<2x128xf32>
    %290 = math.log %289 : vector<2x128xf32>
    %291 = arith.mulf %289, %290 : vector<2x128xf32>
    %292 = vector.broadcast %7 : f32 to vector<2x128xf32>
    %293 = arith.mulf %292, %291 : vector<2x128xf32>
    %294 = arith.addf %269, %293 : vector<2x128xf32>
    %295 = vector.broadcast %19 : f32 to vector<2x128xf32>
    %296 = arith.mulf %295, %291 : vector<2x128xf32>
    %297 = arith.addf %272, %296 : vector<2x128xf32>
    %298 = vector.broadcast %31 : f32 to vector<2x128xf32>
    %299 = arith.mulf %298, %291 : vector<2x128xf32>
    %300 = arith.addf %275, %299 : vector<2x128xf32>
    %301 = vector.broadcast %43 : f32 to vector<2x128xf32>
    %302 = arith.mulf %301, %291 : vector<2x128xf32>
    %303 = arith.addf %278, %302 : vector<2x128xf32>
    %cst_40 = arith.constant 1.000000e+00 : f32
    %304 = vector.broadcast %cst_40 : f32 to vector<2x128xf32>
    %305 = arith.subf %61, %304 : vector<2x128xf32>
    %cst_41 = arith.constant 1.000000e+00 : f32
    %306 = vector.broadcast %cst_41 : f32 to vector<2x128xf32>
    %307 = arith.subf %75, %306 : vector<2x128xf32>
    %308 = arith.mulf %305, %305 : vector<2x128xf32>
    %309 = arith.mulf %307, %307 : vector<2x128xf32>
    %310 = arith.addf %308, %309 : vector<2x128xf32>
    %cst_42 = arith.constant 0.000000e+00 : f32
    %311 = vector.broadcast %cst_42 : f32 to vector<2x128xf32>
    %312 = arith.cmpf oeq, %310, %311 : vector<2x128xf32>
    %cst_43 = arith.constant 1.000000e+00 : f32
    %313 = vector.broadcast %cst_43 : f32 to vector<2x128xf32>
    %314 = arith.select %312, %313, %310 : vector<2x128xi1>, vector<2x128xf32>
    %315 = math.log %314 : vector<2x128xf32>
    %316 = arith.mulf %314, %315 : vector<2x128xf32>
    %317 = vector.broadcast %8 : f32 to vector<2x128xf32>
    %318 = arith.mulf %317, %316 : vector<2x128xf32>
    %319 = arith.addf %294, %318 : vector<2x128xf32>
    %320 = vector.broadcast %20 : f32 to vector<2x128xf32>
    %321 = arith.mulf %320, %316 : vector<2x128xf32>
    %322 = arith.addf %297, %321 : vector<2x128xf32>
    %323 = vector.broadcast %32 : f32 to vector<2x128xf32>
    %324 = arith.mulf %323, %316 : vector<2x128xf32>
    %325 = arith.addf %300, %324 : vector<2x128xf32>
    %326 = vector.broadcast %44 : f32 to vector<2x128xf32>
    %327 = arith.mulf %326, %316 : vector<2x128xf32>
    %328 = arith.addf %303, %327 : vector<2x128xf32>
    %c0_44 = arith.constant 0 : index
    %c0_45 = arith.constant 0 : index
    %c0_46 = arith.constant 0 : index
    %329 = vector.load %arg2[%c0_44, %c0_45, %c0_46] : memref<2x2x128xf32, #tpu.memory_space<vmem>>, vector<1x2x128xf32>
    %330 = vector.shape_cast %329 : vector<1x2x128xf32> to vector<2x128xf32>
    %331 = vector.shape_cast %319 : vector<2x128xf32> to vector<1x2x128xf32>
    tpu.vector_store %arg2[%c0_44, %c0_45, %c0_46], %331 {strides = array<i32>} : memref<2x2x128xf32, #tpu.memory_space<vmem>>, vector<1x2x128xf32>,
    %c0_47 = arith.constant 0 : index
    %c0_48 = arith.constant 0 : index
    %c0_49 = arith.constant 0 : index
    %332 = vector.load %arg3[%c0_47, %c0_48, %c0_49] : memref<2x2x128xf32, #tpu.memory_space<vmem>>, vector<1x2x128xf32>
    %333 = vector.shape_cast %332 : vector<1x2x128xf32> to vector<2x128xf32>
    %334 = vector.shape_cast %322 : vector<2x128xf32> to vector<1x2x128xf32>
    tpu.vector_store %arg3[%c0_47, %c0_48, %c0_49], %334 {strides = array<i32>} : memref<2x2x128xf32, #tpu.memory_space<vmem>>, vector<1x2x128xf32>,
    %c1_50 = arith.constant 1 : index
    %c0_51 = arith.constant 0 : index
    %c0_52 = arith.constant 0 : index
    %335 = vector.load %arg2[%c1_50, %c0_51, %c0_52] : memref<2x2x128xf32, #tpu.memory_space<vmem>>, vector<1x2x128xf32>
    %336 = vector.shape_cast %335 : vector<1x2x128xf32> to vector<2x128xf32>
    %337 = vector.shape_cast %325 : vector<2x128xf32> to vector<1x2x128xf32>
    tpu.vector_store %arg2[%c1_50, %c0_51, %c0_52], %337 {strides = array<i32>} : memref<2x2x128xf32, #tpu.memory_space<vmem>>, vector<1x2x128xf32>,
    %c1_53 = arith.constant 1 : index
    %c0_54 = arith.constant 0 : index
    %c0_55 = arith.constant 0 : index
    %338 = vector.load %arg3[%c1_53, %c0_54, %c0_55] : memref<2x2x128xf32, #tpu.memory_space<vmem>>, vector<1x2x128xf32>
    %339 = vector.shape_cast %338 : vector<1x2x128xf32> to vector<2x128xf32>
    %340 = vector.shape_cast %328 : vector<2x128xf32> to vector<1x2x128xf32>
    tpu.vector_store %arg3[%c1_53, %c0_54, %c0_55], %340 {strides = array<i32>} : memref<2x2x128xf32, #tpu.memory_space<vmem>>, vector<1x2x128xf32>,
    return
  }
  func.func @transform_0(%arg0: i32, %arg1: memref<48xf32, #tpu.memory_space<smem>>) -> (i32, i32, i32) {
    %c0_i32 = arith.constant 0 : i32
    %c0_i32_0 = arith.constant 0 : i32
    %c0_i32_1 = arith.constant 0 : i32
    return %c0_i32, %arg0, %c0_i32_0 : i32, i32, i32
  }
  func.func @transform_1(%arg0: i32, %arg1: memref<48xf32, #tpu.memory_space<smem>>) -> (i32, i32, i32) {
    %c0_i32 = arith.constant 0 : i32
    %c0_i32_0 = arith.constant 0 : i32
    %c0_i32_1 = arith.constant 0 : i32
    return %c0_i32, %arg0, %c0_i32_0 : i32, i32, i32
  }
}

</mosaic_0001>

<llo_original>
// kernel: a_call__.1
$region0: #{a_call__.1}
  #allocation0 [shape = 'u32[]', space=smem, size = 0x4, offset = 0x4, fixed_abs, tag = 'smem constant byte address 0x4 - core index']
  #allocation1 [shape = 'u32[144,128]{1,0:T(1,128)}', space=vmem, size = 0x12000, scoped, tag = 'internal scratch']
  #allocation2 [shape = 's32[1]{0}', space=sflag, size = 0x4, scoped, tag = 'scoped memory for a_call__.1']
  #allocation3 [shape = 'u8[512]{0}', space=smem, size = 0x200, scoped, tag = 'prefetched SMEM operand 0']
  %s0 = inlined_call_operand.vmem [shape: f32[48], index: 0, kind: input, shape index: {}]
  %s1 = inlined_call_operand.vmem [shape: f32[2,2,128], index: 1, kind: output, shape index: {0}]
  %s2 = inlined_call_operand.vmem [shape: f32[2,2,128], index: 2, kind: output, shape index: {1}]
  %3 = xla_tuple %s1, %s2
  %s4 = sld [smem:[#allocation0]]
  $region18: #{a_call__.1} parent=0
    _
  %s6 = ssub.s32 1, %s4
  %s7 = scalar_select 0, %s6, %s4
  %s8 = sshll.u32 %s0, 4
  %s9 = int_to_ptr.vmem [resolvable:$true] %s8
  %11 = dma.vmem_to_smem %s9, 16, [#allocation3], [#allocation2]
  %12 = dma.done [#allocation2], 16
  %13 = sfence
  %s14 = sld [smem:[#allocation3]]
  %s15 = sld [smem:[#allocation3 + $0x1]]
  %s16 = sld [smem:[#allocation3 + $0x2]]
  %s17 = sld [smem:[#allocation3 + $0x3]]
  %s18 = sld [smem:[#allocation3 + $0x4]]
  %s19 = sld [smem:[#allocation3 + $0x5]]
  %s20 = sld [smem:[#allocation3 + $0x6]]
  %s21 = sld [smem:[#allocation3 + $0x7]]
  %s22 = sld [smem:[#allocation3 + $0x8]]
  %s23 = sld [smem:[#allocation3 + $0x9]]
  %s24 = sld [smem:[#allocation3 + $0xa]]
  %s25 = sld [smem:[#allocation3 + $0xb]]
  %s26 = sld [smem:[#allocation3 + $0xc]]
  %s27 = sld [smem:[#allocation3 + $0xd]]
  %s28 = sld [smem:[#allocation3 + $0xe]]
  %s29 = sld [smem:[#allocation3 + $0xf]]
  %s30 = sld [smem:[#allocation3 + $0x10]]
  %s31 = sld [smem:[#allocation3 + $0x11]]
  %s32 = sld [smem:[#allocation3 + $0x12]]
  %s33 = sld [smem:[#allocation3 + $0x13]]
  %s34 = sld [smem:[#allocation3 + $0x14]]
  %s35 = sld [smem:[#allocation3 + $0x15]]
  %s36 = sld [smem:[#allocation3 + $0x16]]
  %s37 = sld [smem:[#allocation3 + $0x17]]
  %s38 = sld [smem:[#allocation3 + $0x18]]
  %s39 = sld [smem:[#allocation3 + $0x19]]
  %s40 = sld [smem:[#allocation3 + $0x1a]]
  %s41 = sld [smem:[#allocation3 + $0x1b]]
  %s42 = sld [smem:[#allocation3 + $0x1c]]
  %s43 = sld [smem:[#allocation3 + $0x1d]]
  %s44 = sld [smem:[#allocation3 + $0x1e]]
  %s45 = sld [smem:[#allocation3 + $0x1f]]
  %s46 = sld [smem:[#allocation3 + $0x20]]
  %s47 = sld [smem:[#allocation3 + $0x21]]
  %s48 = sld [smem:[#allocation3 + $0x22]]
  %s49 = sld [smem:[#allocation3 + $0x23]]
  %s50 = sld [smem:[#allocation3 + $0x24]]
  %s51 = sld [smem:[#allocation3 + $0x25]]
  %s52 = sld [smem:[#allocation3 + $0x26]]
  %s53 = sld [smem:[#allocation3 + $0x27]]
  %s54 = sld [smem:[#allocation3 + $0x28]]
  %s55 = sld [smem:[#allocation3 + $0x29]]
  %s56 = sld [smem:[#allocation3 + $0x2a]]
  %s57 = sld [smem:[#allocation3 + $0x2b]]
  %s58 = sld [smem:[#allocation3 + $0x2c]]
  %s59 = sld [smem:[#allocation3 + $0x2d]]
  %s60 = sld [smem:[#allocation3 + $0x2e]]
  %s61 = sld [smem:[#allocation3 + $0x2f]]
  %v62 = vlaneseq
  %v63 = vand.u32 %v62, 127
  %v64 = vcvt.s32.f32 %v63
  %v65 = vadd.f32 %v64, 0.5
  %v66 = vmul.f32 %v65, 0.0625
  %v67 = vfloor.f32 %v66
  %v68 = vmul.f32 %v67, 16.0
  %v69 = vsub.f32 %v64, %v68
  %v70 = vmul.f32 %v69, 0.13333334
  %v71 = vsub.f32 %v70, 1.0
  %v72 = vlaneseq
  %v73 = vshrl.u32 %v72, 7
  %v74 = vcvt.s32.f32 %v73
  %s75 = smul.u32 0, 2
  %s76 = scvt.s32.f32 %s75
  %s77 = sadd.f32 %s76, 0.0
  %v78 = vstv %s77
  %v79 = vadd.f32 %v78, %v74
  %v80 = vmul.f32 %v79, 8.0
  %v81 = vadd.f32 %v80, %v67
  %v82 = vmul.f32 %v81, 0.13333334
  %v83 = vsub.f32 %v82, 1.0
  %v84 = vstv %s24
  %v85 = vmul.f32 %v84, %v71
  %v86 = vstv %s23
  %v87 = vadd.f32 %v86, %v85
  %v88 = vstv %s25
  %v89 = vmul.f32 %v88, %v83
  %v90 = vadd.f32 %v87, %v89
  %v91 = vstv %s36
  %v92 = vmul.f32 %v91, %v71
  %v93 = vstv %s35
  %v94 = vadd.f32 %v93, %v92
  %v95 = vstv %s37
  %v96 = vmul.f32 %v95, %v83
  %v97 = vadd.f32 %v94, %v96
  %v98 = vstv %s48
  %v99 = vmul.f32 %v98, %v71
  %v100 = vstv %s47
  %v101 = vadd.f32 %v100, %v99
  %v102 = vstv %s49
  %v103 = vmul.f32 %v102, %v83
  %v104 = vadd.f32 %v101, %v103
  %v105 = vstv %s60
  %v106 = vmul.f32 %v105, %v71
  %v107 = vstv %s59
  %v108 = vadd.f32 %v107, %v106
  %v109 = vstv %s61
  %v110 = vmul.f32 %v109, %v83
  %v111 = vadd.f32 %v108, %v110
  %v112 = vsub.f32 %v71, -1.0
  %v113 = vsub.f32 %v83, -1.0
  %v114 = vmul.f32 %v112, %v112
  %v115 = vmul.f32 %v113, %v113
  %v116 = vadd.f32 %v114, %v115
  %vm117 = vcmp.eq.f32.partialorder %v116, 0.0
  %v118 = vsel %vm117, 1.0, %v116
  %v119 = vlog2.pop %v118
  %v120 = vmul.f32 %v119, 0.6931472
  %v121 = vmul.f32 %v118, %v120
  %v122 = vstv %s14
  %v123 = vmul.f32 %v122, %v121
  %v124 = vadd.f32 %v90, %v123
  %v125 = vstv %s26
  %v126 = vmul.f32 %v125, %v121
  %v127 = vadd.f32 %v97, %v126
  %v128 = vstv %s38
  %v129 = vmul.f32 %v128, %v121
  %v130 = vadd.f32 %v104, %v129
  %v131 = vstv %s50
  %v132 = vmul.f32 %v131, %v121
  %v133 = vadd.f32 %v111, %v132
  %v134 = vmul.f32 %v83, %v83
  %v135 = vadd.f32 %v114, %v134
  %vm136 = vcmp.eq.f32.partialorder %v135, 0.0
  %v137 = vsel %vm136, 1.0, %v135
  %v138 = vlog2.pop %v137
  %v139 = vmul.f32 %v138, 0.6931472
  %v140 = vmul.f32 %v137, %v139
  %v141 = vstv %s15
  %v142 = vmul.f32 %v141, %v140
  %v143 = vadd.f32 %v124, %v142
  %v144 = vstv %s27
  %v145 = vmul.f32 %v144, %v140
  %v146 = vadd.f32 %v127, %v145
  %v147 = vstv %s39
  %v148 = vmul.f32 %v147, %v140
  %v149 = vadd.f32 %v130, %v148
  %v150 = vstv %s51
  %v151 = vmul.f32 %v150, %v140
  %v152 = vadd.f32 %v133, %v151
  %v153 = vsub.f32 %v83, 1.0
  %v154 = vmul.f32 %v153, %v153
  %v155 = vadd.f32 %v114, %v154
  %vm156 = vcmp.eq.f32.partialorder %v155, 0.0
  %v157 = vsel %vm156, 1.0, %v155
  %v158 = vlog2.pop %v157
  %v159 = vmul.f32 %v158, 0.6931472
  %v160 = vmul.f32 %v157, %v159
  %v161 = vstv %s16
  %v162 = vmul.f32 %v161, %v160
  %v163 = vadd.f32 %v143, %v162
  %v164 = vstv %s28
  %v165 = vmul.f32 %v164, %v160
  %v166 = vadd.f32 %v146, %v165
  %v167 = vstv %s40
  %v168 = vmul.f32 %v167, %v160
  %v169 = vadd.f32 %v149, %v168
  %v170 = vstv %s52
  %v171 = vmul.f32 %v170, %v160
  %v172 = vadd.f32 %v152, %v171
  %v173 = vmul.f32 %v71, %v71
  %v174 = vadd.f32 %v173, %v115
  %vm175 = vcmp.eq.f32.partialorder %v174, 0.0
  %v176 = vsel %vm175, 1.0, %v174
  %v177 = vlog2.pop %v176
  %v178 = vmul.f32 %v177, 0.6931472
  %v179 = vmul.f32 %v176, %v178
  %v180 = vstv %s17
  %v181 = vmul.f32 %v180, %v179
  %v182 = vadd.f32 %v163, %v181
  %v183 = vstv %s29
  %v184 = vmul.f32 %v183, %v179
  %v185 = vadd.f32 %v166, %v184
  %v186 = vstv %s41
  %v187 = vmul.f32 %v186, %v179
  %v188 = vadd.f32 %v169, %v187
  %v189 = vstv %s53
  %v190 = vmul.f32 %v189, %v179
  %v191 = vadd.f32 %v172, %v190
  %v192 = vadd.f32 %v173, %v134
  %vm193 = vcmp.eq.f32.partialorder %v192, 0.0
  %v194 = vsel %vm193, 1.0, %v192
  %v195 = vlog2.pop %v194
  %v196 = vmul.f32 %v195, 0.6931472
  %v197 = vmul.f32 %v194, %v196
  %v198 = vstv %s18
  %v199 = vmul.f32 %v198, %v197
  %v200 = vadd.f32 %v182, %v199
  %v201 = vstv %s30
  %v202 = vmul.f32 %v201, %v197
  %v203 = vadd.f32 %v185, %v202
  %v204 = vstv %s42
  %v205 = vmul.f32 %v204, %v197
  %v206 = vadd.f32 %v188, %v205
  %v207 = vstv %s54
  %v208 = vmul.f32 %v207, %v197
  %v209 = vadd.f32 %v191, %v208
  %v210 = vadd.f32 %v173, %v154
  %vm211 = vcmp.eq.f32.partialorder %v210, 0.0
  %v212 = vsel %vm211, 1.0, %v210
  %v213 = vlog2.pop %v212
  %v214 = vmul.f32 %v213, 0.6931472
  %v215 = vmul.f32 %v212, %v214
  %v216 = vstv %s19
  %v217 = vmul.f32 %v216, %v215
  %v218 = vadd.f32 %v200, %v217
  %v219 = vstv %s31
  %v220 = vmul.f32 %v219, %v215
  %v221 = vadd.f32 %v203, %v220
  %v222 = vstv %s43
  %v223 = vmul.f32 %v222, %v215
  %v224 = vadd.f32 %v206, %v223
  %v225 = vstv %s55
  %v226 = vmul.f32 %v225, %v215
  %v227 = vadd.f32 %v209, %v226
  %v228 = vsub.f32 %v71, 1.0
  %v229 = vmul.f32 %v228, %v228
  %v230 = vadd.f32 %v229, %v115
  %vm231 = vcmp.eq.f32.partialorder %v230, 0.0
  %v232 = vsel %vm231, 1.0, %v230
  %v233 = vlog2.pop %v232
  %v234 = vmul.f32 %v233, 0.6931472
  %v235 = vmul.f32 %v232, %v234
  %v236 = vstv %s20
  %v237 = vmul.f32 %v236, %v235
  %v238 = vadd.f32 %v218, %v237
  %v239 = vstv %s32
  %v240 = vmul.f32 %v239, %v235
  %v241 = vadd.f32 %v221, %v240
  %v242 = vstv %s44
  %v243 = vmul.f32 %v242, %v235
  %v244 = vadd.f32 %v224, %v243
  %v245 = vstv %s56
  %v246 = vmul.f32 %v245, %v235
  %v247 = vadd.f32 %v227, %v246
  %v248 = vadd.f32 %v229, %v134
  %vm249 = vcmp.eq.f32.partialorder %v248, 0.0
  %v250 = vsel %vm249, 1.0, %v248
  %v251 = vlog2.pop %v250
  %v252 = vmul.f32 %v251, 0.6931472
  %v253 = vmul.f32 %v250, %v252
  %v254 = vstv %s21
  %v255 = vmul.f32 %v254, %v253
  %v256 = vadd.f32 %v238, %v255
  %v257 = vstv %s33
  %v258 = vmul.f32 %v257, %v253
  %v259 = vadd.f32 %v241, %v258
  %v260 = vstv %s45
  %v261 = vmul.f32 %v260, %v253
  %v262 = vadd.f32 %v244, %v261
  %v263 = vstv %s57
  %v264 = vmul.f32 %v263, %v253
  %v265 = vadd.f32 %v247, %v264
  %v266 = vadd.f32 %v229, %v154
  %vm267 = vcmp.eq.f32.partialorder %v266, 0.0
  %v268 = vsel %vm267, 1.0, %v266
  %v269 = vlog2.pop %v268
  %v270 = vmul.f32 %v269, 0.6931472
  %v271 = vmul.f32 %v268, %v270
  %v272 = vstv %s22
  %v273 = vmul.f32 %v272, %v271
  %v274 = vadd.f32 %v256, %v273
  %v275 = vstv %s34
  %v276 = vmul.f32 %v275, %v271
  %v277 = vadd.f32 %v259, %v276
  %v278 = vstv %s46
  %v279 = vmul.f32 %v278, %v271
  %v280 = vadd.f32 %v262, %v279
  %v281 = vstv %s58
  %v282 = vmul.f32 %v281, %v271
  %v283 = vadd.f32 %v265, %v282
  %284 = vst [vmem:[%s1] sm:$0x3] %v274
  %285 = vst [vmem:[%s2] sm:$0x3] %v277
  %s286 = scalar_lea.vmem %s1, 2
  %287 = vst [vmem:[%s286] sm:$0x3] %v280
  %s288 = scalar_lea.vmem %s2, 2
  %289 = vst [vmem:[%s288] sm:$0x3] %v283
  // Predicated region
  $region2: #{a_call__.1} parent=0 // pred_check
    _
  $region3: #{a_call__.1} parent=0 // pred_check_branch
    %291 = sbr.rel (0) target = $region5
  $region4: #{a_call__.1} parent=0 // pred_region
    _
  $region5: #{a_call__.1} parent=0 // pred_fallthru
    _
  // Predicated region
  $region6: #{a_call__.1} parent=0 // pred_check
    _
  $region7: #{a_call__.1} parent=0 // pred_check_branch
    %293 = sbr.rel (0) target = $region9
  $region8: #{a_call__.1} parent=0 // pred_region
    _
  $region9: #{a_call__.1} parent=0 // pred_fallthru
    _
  // Predicated region
  $region10: #{a_call__.1} parent=0 // pred_check
    _
  $region11: #{a_call__.1} parent=0 // pred_check_branch
    %295 = sbr.rel (0) target = $region13
  $region12: #{a_call__.1} parent=0 // pred_region
    _
  $region13: #{a_call__.1} parent=0 // pred_fallthru
    _
  // Predicated region
  $region14: #{a_call__.1} parent=0 // pred_check
    _
  $region15: #{a_call__.1} parent=0 // pred_check_branch
    %297 = sbr.rel (0) target = $region17
  $region16: #{a_call__.1} parent=0 // pred_region
    _
  $region17: #{a_call__.1} parent=0 // pred_fallthru
    _

</llo_original>
